<compile_context>
chip_gen: v7x
topology: tpu7x:2x2x1
jax: 0.10.0
libtpu: 0.0.40
codegen_flags: <defaults>
</compile_context>

<pallas_src>
import jax
import jax.numpy as jnp
from jax.experimental import pallas as pl
from jax.experimental.pallas import tpu as pltpu

IN_DIM = 190
H1 = 380
H2 = 85
H3 = 40
NUM_OF_NODES = 16  # synthetic stand-in for graphs.shape[1]

# lane-aligned (zero-padded) dims used for weights / intermediates
H1_PAD = 384    # 380 -> 384
H2_PAD = 128    # 85  -> 128
H3_PAD = 128    # fused heads: 40 + 40 -> 128
OUT_PAD = 128   # fused logits: 2 * 16 -> 128

MAX_TB = 512           # batch-tile cap (keeps VMEM use well under v7x's 64 MiB)
TARGET_GRID_STEPS = 4  # >=2 balanced grid steps per TensorCore on v7x megacore
MIN_B = 16             # native bf16 sublane tile; tiny batches padded to this
NEG_INF = -1e30


def _round_up(n, m):
    return ((n + m - 1) // m) * m


def _mlp_kernel(x_ref, w1_ref, b1_ref, w3_ref, b3_ref,
                w45_ref, b45_ref, w67_ref, b67_ref, out_ref):
    # trunk: fc1 -> relu -> fc3 -> relu   (bf16 MXU operands, f32 accumulation)
    x = x_ref[...].astype(jnp.bfloat16)           # cast in-kernel; x streams as f32
    h = jnp.dot(x, w1_ref[...], preferred_element_type=jnp.float32) + b1_ref[...]
    h = jnp.maximum(h, 0.0)
    h = jnp.dot(h.astype(jnp.bfloat16), w3_ref[...],
                preferred_element_type=jnp.float32) + b3_ref[...]
    h = jnp.maximum(h, 0.0)

    # fused heads: (fc4 | fc5) -> relu, then block-diagonal (fc6 / fc7) -> logits
    h12 = jnp.dot(h.astype(jnp.bfloat16), w45_ref[...],
                  preferred_element_type=jnp.float32) + b45_ref[...]
    h12 = jnp.maximum(h12, 0.0)
    # b67 pad lanes (>= 2*N) carry -1e30, so padding vanishes after exp().
    logits = jnp.dot(h12.astype(jnp.bfloat16), w67_ref[...],
                     preferred_element_type=jnp.float32) + b67_ref[...]

    # dual masked softmax with a single exp pass:
    #   head1 in lanes [0,N), head2 in lanes [N,2N), the rest is -1e30 padding.
    lane = jax.lax.broadcasted_iota(jnp.int32, logits.shape, 1)
    is_h1 = lane < NUM_OF_NODES
    m1 = jnp.max(jnp.where(is_h1, logits, NEG_INF), axis=-1, keepdims=True)
    m2 = jnp.max(jnp.where(is_h1, NEG_INF, logits), axis=-1, keepdims=True)
    e = jnp.exp(logits - jnp.where(is_h1, m1, m2))     # pad lanes -> exp(-1e30) == 0
    s1 = jnp.sum(jnp.where(is_h1, e, 0.0), axis=-1, keepdims=True)
    s2 = jnp.sum(e, axis=-1, keepdims=True) - s1       # pad lanes contribute 0
    # exact divide (NOT approx reciprocal) so each head's row sums to 1 in f32
    probs = e / jnp.where(is_h1, s1, s2)
    # one lane-dense (tb,128) bf16 store: lanes [0,N)=softmax1, [N,2N)=softmax2, rest 0
    out_ref[...] = probs.astype(out_ref.dtype)


def prepare_params(params):
    """One-time host-side pad / fuse / bf16-cast of the nn.Linear parameters."""
    f32, bf16 = jnp.float32, jnp.bfloat16
    N = NUM_OF_NODES

    def pad2(a, rows, cols):
        return jnp.zeros((rows, cols), f32).at[:a.shape[0], :a.shape[1]].set(a)

    w1 = pad2(params["w1"], IN_DIM, H1_PAD).astype(bf16)   # (190, 384): rows unpadded
    b1 = pad2(params["b1"], 1, H1_PAD)
    w3 = pad2(params["w3"], H1_PAD, H2_PAD).astype(bf16)
    b3 = pad2(params["b3"], 1, H2_PAD)

    # fuse fc4 | fc5 along the output axis
    w45 = jnp.zeros((H2_PAD, H3_PAD), f32)
    w45 = w45.at[:H2, :H3].set(params["w4"]).at[:H2, H3:2 * H3].set(params["w5"])
    w45 = w45.astype(bf16)
    b45 = jnp.zeros((1, H3_PAD), f32)
    b45 = b45.at[:, :H3].set(params["b4"]).at[:, H3:2 * H3].set(params["b5"])

    # block-diagonal fc6 / fc7 (exact zeros off-diagonal -> no cross-head leak)
    w67 = jnp.zeros((H3_PAD, OUT_PAD), f32)
    w67 = w67.at[:H3, :N].set(params["w6"]).at[H3:2 * H3, N:2 * N].set(params["w7"])
    w67 = w67.astype(bf16)
    # pad lanes get -1e30 so they vanish through exp() without extra in-kernel masks
    b67 = jnp.full((1, OUT_PAD), NEG_INF, f32)
    b67 = b67.at[:, :N].set(params["b6"]).at[:, N:2 * N].set(params["b7"])

    return dict(w1=w1, b1=b1, w3=w3, b3=b3, w45=w45, b45=b45, w67=w67, b67=b67)


def _resident_spec(a):
    # weights/biases: full-array block with a constant index -> fetched once,
    # stay resident in VMEM across the batch loop
    return pl.BlockSpec(a.shape, lambda i: (0, 0))


@jax.jit
def compress_matrix_network(x, prepped):
    """x: (B, 190) float32; prepped: output of prepare_params. Returns (B,16) x2."""
    B = x.shape[0]
    xb = x if B >= MIN_B else jnp.pad(x, ((0, MIN_B - B), (0, 0)))
    Bp = xb.shape[0]

    # batch tile: multiple of 16, aims for >= TARGET_GRID_STEPS steps, capped for VMEM
    tb = min(MAX_TB, max(MIN_B, _round_up(pl.cdiv(Bp, TARGET_GRID_STEPS), 16)))
    grid = (pl.cdiv(Bp, tb),)   # ragged last block handled by Pallas (no host padding)

    args = (xb,
            prepped["w1"], prepped["b1"],
            prepped["w3"], prepped["b3"],
            prepped["w45"], prepped["b45"],
            prepped["w67"], prepped["b67"])

    out = pl.pallas_call(
        _mlp_kernel,
        grid=grid,
        in_specs=[pl.BlockSpec((tb, IN_DIM), lambda i: (i, 0))]  # full minor dim: 128-rule exempt
                 + [_resident_spec(a) for a in args[1:]],
        out_specs=pl.BlockSpec((tb, OUT_PAD), lambda i: (i, 0)),
        out_shape=jax.ShapeDtypeStruct((Bp, OUT_PAD), jnp.bfloat16),
        compiler_params=pltpu.CompilerParams(
            dimension_semantics=("parallel",),    # v7x megacore: shard batch tiles
            vmem_limit_bytes=32 << 20),
    )(*args)

    # single lane slice over the packed heads, then split (module returns f32)
    heads = out[:B, :2 * NUM_OF_NODES].astype(jnp.float32)
    return heads[:, :NUM_OF_NODES], heads[:, NUM_OF_NODES:]


def init_params(key):
    """Deterministic init matching nn.Linear shapes (weights stored transposed)."""
    dims = {
        "1": (IN_DIM, H1),
        "3": (H1, H2),
        "4": (H2, H3),
        "5": (H2, H3),
        "6": (H3, NUM_OF_NODES),
        "7": (H3, NUM_OF_NODES),
    }
    params = {}
    for name, (fan_in, fan_out) in dims.items():
        key, kw, kb = jax.random.split(key, 3)
        bound = 1.0 / jnp.sqrt(fan_in)
        params[f"w{name}"] = jax.random.uniform(
            kw, (fan_in, fan_out), jnp.float32, -bound, bound)
        params[f"b{name}"] = jax.random.uniform(
            kb, (1, fan_out), jnp.float32, -bound, bound)
    return params


def _reference_f32(x, params):
    h = jax.nn.relu(x @ params["w1"] + params["b1"])
    h = jax.nn.relu(h @ params["w3"] + params["b3"])
    h1 = jax.nn.relu(h @ params["w4"] + params["b4"])
    l1 = h1 @ params["w6"] + params["b6"]
    h2 = jax.nn.relu(h @ params["w5"] + params["b5"])
    l2 = h2 @ params["w7"] + params["b7"]
    return jax.nn.softmax(l1, axis=1), jax.nn.softmax(l2, axis=1)


if __name__ == "__main__":
    key = jax.random.PRNGKey(0)
    key, kx = jax.random.split(key)
    params = init_params(key)
    prepped = prepare_params(params)

    # small batch (spec-sized, exercises the B<16 pad) + a multi-tile batch with
    # a ragged last block (exercises the cdiv grid / megacore split)
    for B in (2, 1030):
        kx, kb = jax.random.split(kx)
        x = jax.random.normal(kb, (B, IN_DIM), jnp.float32)

        out1, out2 = compress_matrix_network(x, prepped)
        jax.block_until_ready((out1, out2))

        assert out1.shape == (B, NUM_OF_NODES) and out2.shape == (B, NUM_OF_NODES)
        # rows are probability distributions; bf16 output quantization bounds the
        # row-sum error by ~2^-9, so 5e-3 is a safe but meaningful tolerance
        s1 = jnp.sum(out1, axis=1)
        s2 = jnp.sum(out2, axis=1)
        assert jnp.allclose(s1, 1.0, atol=5e-3), float(jnp.max(jnp.abs(s1 - 1.0)))
        assert jnp.allclose(s2, 1.0, atol=5e-3), float(jnp.max(jnp.abs(s2 - 1.0)))
        # bf16 MXU operands + bf16 output -> loose tolerance vs pure-f32 reference
        ref1, ref2 = _reference_f32(x, params)
        err1 = float(jnp.max(jnp.abs(out1 - ref1)))
        err2 = float(jnp.max(jnp.abs(out2 - ref2)))
        assert err1 < 2e-2, err1
        assert err2 < 2e-2, err2

    print("KERNEL_OK")
</pallas_src>

<mosaic_0001>
module attributes {stable_mosaic.version = 11 : i64} {
  func.func @_mlp_kernel(%arg0: i32, %arg1: memref<16x190xf32, #tpu.memory_space<vmem>>, %arg2: memref<190x384xbf16, #tpu.memory_space<vmem>>, %arg3: memref<1x384xf32, #tpu.memory_space<vmem>>, %arg4: memref<384x128xbf16, #tpu.memory_space<vmem>>, %arg5: memref<1x128xf32, #tpu.memory_space<vmem>>, %arg6: memref<128x128xbf16, #tpu.memory_space<vmem>>, %arg7: memref<1x128xf32, #tpu.memory_space<vmem>>, %arg8: memref<128x128xbf16, #tpu.memory_space<vmem>>, %arg9: memref<1x128xf32, #tpu.memory_space<vmem>>, %arg10: memref<16x128xbf16, #tpu.memory_space<vmem>>) attributes {dimension_semantics = [#tpu.dimension_semantics<parallel>], iteration_bounds = array<i64: 1>, scalar_prefetch = 0 : i64, scratch_operands = 0 : i64, tpu.core_type = #tpu.core_type<tc>, window_params = [{transform_indices = @transform_0, window_bounds = array<i64: 16, 190>}, {pipeline_mode = #tpu.pipeline_mode<synchronous>, transform_indices = @transform_1, window_bounds = array<i64: 190, 384>}, {pipeline_mode = #tpu.pipeline_mode<synchronous>, transform_indices = @transform_2, window_bounds = array<i64: 1, 384>}, {pipeline_mode = #tpu.pipeline_mode<synchronous>, transform_indices = @transform_3, window_bounds = array<i64: 384, 128>}, {pipeline_mode = #tpu.pipeline_mode<synchronous>, transform_indices = @transform_4, window_bounds = array<i64: 1, 128>}, {pipeline_mode = #tpu.pipeline_mode<synchronous>, transform_indices = @transform_5, window_bounds = array<i64: 128, 128>}, {pipeline_mode = #tpu.pipeline_mode<synchronous>, transform_indices = @transform_6, window_bounds = array<i64: 1, 128>}, {pipeline_mode = #tpu.pipeline_mode<synchronous>, transform_indices = @transform_7, window_bounds = array<i64: 128, 128>}, {pipeline_mode = #tpu.pipeline_mode<synchronous>, transform_indices = @transform_8, window_bounds = array<i64: 1, 128>}, {transform_indices = @transform_9, window_bounds = array<i64: 16, 128>}]} {
    %c0 = arith.constant 0 : index
    %c0_0 = arith.constant 0 : index
    %0 = vector.load %arg1[%c0, %c0_0] : memref<16x190xf32, #tpu.memory_space<vmem>>, vector<16x190xf32>
    %1 = arith.truncf %0 : vector<16x190xf32> to vector<16x190xbf16>
    %c0_1 = arith.constant 0 : index
    %c0_2 = arith.constant 0 : index
    %2 = vector.load %arg2[%c0_1, %c0_2] : memref<190x384xbf16, #tpu.memory_space<vmem>>, vector<190x384xbf16>
    %cst = arith.constant dense<0.000000e+00> : vector<16x384xf32>
    %3 = tpu.matmul %1, %2, %cst {dimension_numbers = #tpu.dot_dimension_numbers<[1], [0], [0], [1], [0, 0, 1, 1], [], []>} : vector<16x190xbf16>, vector<190x384xbf16>, vector<16x384xf32> -> vector<16x384xf32>
    %c0_3 = arith.constant 0 : index
    %c0_4 = arith.constant 0 : index
    %4 = vector.load %arg3[%c0_3, %c0_4] : memref<1x384xf32, #tpu.memory_space<vmem>>, vector<1x384xf32>
    %5 = vector.broadcast %4 : vector<1x384xf32> to vector<16x384xf32>
    %6 = arith.addf %3, %5 : vector<16x384xf32>
    %cst_5 = arith.constant 0.000000e+00 : f32
    %7 = vector.broadcast %cst_5 : f32 to vector<16x384xf32>
    %8 = arith.maximumf %6, %7 : vector<16x384xf32>
    %9 = arith.truncf %8 : vector<16x384xf32> to vector<16x384xbf16>
    %c0_6 = arith.constant 0 : index
    %c0_7 = arith.constant 0 : index
    %10 = vector.load %arg4[%c0_6, %c0_7] : memref<384x128xbf16, #tpu.memory_space<vmem>>, vector<384x128xbf16>
    %cst_8 = arith.constant dense<0.000000e+00> : vector<16x128xf32>
    %11 = tpu.matmul %9, %10, %cst_8 {dimension_numbers = #tpu.dot_dimension_numbers<[1], [0], [0], [1], [0, 0, 1, 1], [], []>} : vector<16x384xbf16>, vector<384x128xbf16>, vector<16x128xf32> -> vector<16x128xf32>
    %c0_9 = arith.constant 0 : index
    %c0_10 = arith.constant 0 : index
    %12 = vector.load %arg5[%c0_9, %c0_10] : memref<1x128xf32, #tpu.memory_space<vmem>>, vector<1x128xf32>
    %13 = vector.broadcast %12 : vector<1x128xf32> to vector<16x128xf32>
    %14 = arith.addf %11, %13 : vector<16x128xf32>
    %cst_11 = arith.constant 0.000000e+00 : f32
    %15 = vector.broadcast %cst_11 : f32 to vector<16x128xf32>
    %16 = arith.maximumf %14, %15 : vector<16x128xf32>
    %17 = arith.truncf %16 : vector<16x128xf32> to vector<16x128xbf16>
    %c0_12 = arith.constant 0 : index
    %c0_13 = arith.constant 0 : index
    %18 = vector.load %arg6[%c0_12, %c0_13] : memref<128x128xbf16, #tpu.memory_space<vmem>>, vector<128x128xbf16>
    %cst_14 = arith.constant dense<0.000000e+00> : vector<16x128xf32>
    %19 = tpu.matmul %17, %18, %cst_14 {dimension_numbers = #tpu.dot_dimension_numbers<[1], [0], [0], [1], [0, 0, 1, 1], [], []>} : vector<16x128xbf16>, vector<128x128xbf16>, vector<16x128xf32> -> vector<16x128xf32>
    %c0_15 = arith.constant 0 : index
    %c0_16 = arith.constant 0 : index
    %20 = vector.load %arg7[%c0_15, %c0_16] : memref<1x128xf32, #tpu.memory_space<vmem>>, vector<1x128xf32>
    %21 = vector.broadcast %20 : vector<1x128xf32> to vector<16x128xf32>
    %22 = arith.addf %19, %21 : vector<16x128xf32>
    %cst_17 = arith.constant 0.000000e+00 : f32
    %23 = vector.broadcast %cst_17 : f32 to vector<16x128xf32>
    %24 = arith.maximumf %22, %23 : vector<16x128xf32>
    %25 = arith.truncf %24 : vector<16x128xf32> to vector<16x128xbf16>
    %c0_18 = arith.constant 0 : index
    %c0_19 = arith.constant 0 : index
    %26 = vector.load %arg8[%c0_18, %c0_19] : memref<128x128xbf16, #tpu.memory_space<vmem>>, vector<128x128xbf16>
    %cst_20 = arith.constant dense<0.000000e+00> : vector<16x128xf32>
    %27 = tpu.matmul %25, %26, %cst_20 {dimension_numbers = #tpu.dot_dimension_numbers<[1], [0], [0], [1], [0, 0, 1, 1], [], []>} : vector<16x128xbf16>, vector<128x128xbf16>, vector<16x128xf32> -> vector<16x128xf32>
    %c0_21 = arith.constant 0 : index
    %c0_22 = arith.constant 0 : index
    %28 = vector.load %arg9[%c0_21, %c0_22] : memref<1x128xf32, #tpu.memory_space<vmem>>, vector<1x128xf32>
    %29 = vector.broadcast %28 : vector<1x128xf32> to vector<16x128xf32>
    %30 = arith.addf %27, %29 : vector<16x128xf32>
    %31 = tpu.iota {dimensions = array<i32: 1>} : vector<16x128xi32>
    %c16_i32 = arith.constant 16 : i32
    %32 = vector.broadcast %c16_i32 : i32 to vector<16x128xi32>
    %33 = arith.cmpi slt, %31, %32 : vector<16x128xi32>
    %cst_23 = arith.constant -1.000000e+30 : f32
    %34 = vector.broadcast %cst_23 : f32 to vector<16x128xf32>
    %35 = arith.select %33, %30, %34 : vector<16x128xi1>, vector<16x128xf32>
    %cst_24 = arith.constant dense<0xFF800000> : vector<16xf32>
    %36 = vector.multi_reduction <maximumf>, %35, %cst_24 [1] : vector<16x128xf32> to vector<16xf32>
    %37 = vector.shape_cast %36 : vector<16xf32> to vector<16x1xf32>
    %cst_25 = arith.constant -1.000000e+30 : f32
    %38 = vector.broadcast %cst_25 : f32 to vector<16x128xf32>
    %39 = arith.select %33, %38, %30 : vector<16x128xi1>, vector<16x128xf32>
    %cst_26 = arith.constant dense<0xFF800000> : vector<16xf32>
    %40 = vector.multi_reduction <maximumf>, %39, %cst_26 [1] : vector<16x128xf32> to vector<16xf32>
    %41 = vector.shape_cast %40 : vector<16xf32> to vector<16x1xf32>
    %42 = vector.shape_cast %37 : vector<16x1xf32> to vector<16x1xf32>
    %43 = vector.broadcast %42 : vector<16x1xf32> to vector<16x128xf32>
    %44 = vector.shape_cast %41 : vector<16x1xf32> to vector<16x1xf32>
    %45 = vector.broadcast %44 : vector<16x1xf32> to vector<16x128xf32>
    %46 = arith.select %33, %43, %45 : vector<16x128xi1>, vector<16x128xf32>
    %47 = arith.subf %30, %46 : vector<16x128xf32>
    %48 = math.exp %47 : vector<16x128xf32>
    %cst_27 = arith.constant 0.000000e+00 : f32
    %49 = vector.broadcast %cst_27 : f32 to vector<16x128xf32>
    %50 = arith.select %33, %48, %49 : vector<16x128xi1>, vector<16x128xf32>
    %cst_28 = arith.constant dense<0.000000e+00> : vector<16xf32>
    %51 = vector.multi_reduction <add>, %50, %cst_28 [1] : vector<16x128xf32> to vector<16xf32>
    %52 = vector.shape_cast %51 : vector<16xf32> to vector<16x1xf32>
    %cst_29 = arith.constant dense<0.000000e+00> : vector<16xf32>
    %53 = vector.multi_reduction <add>, %48, %cst_29 [1] : vector<16x128xf32> to vector<16xf32>
    %54 = vector.shape_cast %53 : vector<16xf32> to vector<16x1xf32>
    %55 = arith.subf %54, %52 : vector<16x1xf32>
    %56 = vector.shape_cast %52 : vector<16x1xf32> to vector<16x1xf32>
    %57 = vector.broadcast %56 : vector<16x1xf32> to vector<16x128xf32>
    %58 = vector.shape_cast %55 : vector<16x1xf32> to vector<16x1xf32>
    %59 = vector.broadcast %58 : vector<16x1xf32> to vector<16x128xf32>
    %60 = arith.select %33, %57, %59 : vector<16x128xi1>, vector<16x128xf32>
    %61 = arith.divf %48, %60 : vector<16x128xf32>
    %62 = arith.truncf %61 : vector<16x128xf32> to vector<16x128xbf16>
    %c0_30 = arith.constant 0 : index
    %c0_31 = arith.constant 0 : index
    %63 = vector.load %arg10[%c0_30, %c0_31] : memref<16x128xbf16, #tpu.memory_space<vmem>>, vector<16x128xbf16>
    tpu.vector_store %arg10[%c0_30, %c0_31], %62 {strides = array<i32>} : memref<16x128xbf16, #tpu.memory_space<vmem>>, vector<16x128xbf16>,
    return
  }
  func.func @transform_0(%arg0: i32) -> (i32, i32) {
    %c0_i32 = arith.constant 0 : i32
    %c0_i32_0 = arith.constant 0 : i32
    return %arg0, %c0_i32 : i32, i32
  }
  func.func @transform_1(%arg0: i32) -> (i32, i32) {
    %c0_i32 = arith.constant 0 : i32
    %c0_i32_0 = arith.constant 0 : i32
    %c0_i32_1 = arith.constant 0 : i32
    return %c0_i32, %c0_i32_0 : i32, i32
  }
  func.func @transform_2(%arg0: i32) -> (i32, i32) {
    %c0_i32 = arith.constant 0 : i32
    %c0_i32_0 = arith.constant 0 : i32
    %c0_i32_1 = arith.constant 0 : i32
    return %c0_i32, %c0_i32_0 : i32, i32
  }
  func.func @transform_3(%arg0: i32) -> (i32, i32) {
    %c0_i32 = arith.constant 0 : i32
    %c0_i32_0 = arith.constant 0 : i32
    %c0_i32_1 = arith.constant 0 : i32
    return %c0_i32, %c0_i32_0 : i32, i32
  }
  func.func @transform_4(%arg0: i32) -> (i32, i32) {
    %c0_i32 = arith.constant 0 : i32
    %c0_i32_0 = arith.constant 0 : i32
    %c0_i32_1 = arith.constant 0 : i32
    return %c0_i32, %c0_i32_0 : i32, i32
  }
  func.func @transform_5(%arg0: i32) -> (i32, i32) {
    %c0_i32 = arith.constant 0 : i32
    %c0_i32_0 = arith.constant 0 : i32
    %c0_i32_1 = arith.constant 0 : i32
    return %c0_i32, %c0_i32_0 : i32, i32
  }
  func.func @transform_6(%arg0: i32) -> (i32, i32) {
    %c0_i32 = arith.constant 0 : i32
    %c0_i32_0 = arith.constant 0 : i32
    %c0_i32_1 = arith.constant 0 : i32
    return %c0_i32, %c0_i32_0 : i32, i32
  }
  func.func @transform_7(%arg0: i32) -> (i32, i32) {
    %c0_i32 = arith.constant 0 : i32
    %c0_i32_0 = arith.constant 0 : i32
    %c0_i32_1 = arith.constant 0 : i32
    return %c0_i32, %c0_i32_0 : i32, i32
  }
  func.func @transform_8(%arg0: i32) -> (i32, i32) {
    %c0_i32 = arith.constant 0 : i32
    %c0_i32_0 = arith.constant 0 : i32
    %c0_i32_1 = arith.constant 0 : i32
    return %c0_i32, %c0_i32_0 : i32, i32
  }
  func.func @transform_9(%arg0: i32) -> (i32, i32) {
    %c0_i32 = arith.constant 0 : i32
    %c0_i32_0 = arith.constant 0 : i32
    return %arg0, %c0_i32 : i32, i32
  }
}

</mosaic_0001>

<llo_original>
// kernel: compress_matrix_network.1
$region0: #{compress_matrix_network.1}
  #allocation0 [shape = 'u32[]', space=smem, size = 0x4, offset = 0x4, fixed_abs, tag = 'smem constant byte address 0x4 - core index']
  #allocation1 [shape = 'u32[144,128]{1,0:T(1,128)}', space=vmem, size = 0x12000, scoped, tag = 'internal scratch']
  %s0 = inlined_call_operand.vmem [shape: f32[16,190], index: 0, kind: input, shape index: {}]
  %s1 = inlined_call_operand.hbm [shape: bf16[190,384], index: 1, kind: input, shape index: {}]
  %s2 = inlined_call_operand.vmem [shape: f32[1,384], index: 2, kind: input, shape index: {}]
  %s3 = inlined_call_operand.hbm [shape: bf16[384,128], index: 3, kind: input, shape index: {}]
  %s4 = inlined_call_operand.hbm [shape: f32[1,128], index: 4, kind: input, shape index: {}]
  %s5 = inlined_call_operand.hbm [shape: bf16[128,128], index: 5, kind: input, shape index: {}]
  %s6 = inlined_call_operand.hbm [shape: f32[1,128], index: 6, kind: input, shape index: {}]
  %s7 = inlined_call_operand.vmem [shape: bf16[128,128], index: 7, kind: input, shape index: {}]
  %s8 = inlined_call_operand.hbm [shape: f32[1,128], index: 8, kind: input, shape index: {}]
  %s9 = inlined_call_operand.vmem [shape: bf16[16,128], index: 9, kind: output, shape index: {}]
  %s10 = sld [smem:[#allocation0]]
  $region70: #{compress_matrix_network.1} parent=0
    _
  %s12 = ssub.s32 1, %s10
  %s13 = scalar_select 0, %s12, %s10
  $region1: #{compress_matrix_network.1} parent=0
    #allocation2 [shape = 'u8[147456]{0}', space=vmem, size = 0x24000, scoped, tag = 'input window, operand 1, single buffered']
    #allocation3 [shape = 's32[1]{0}', space=sflag, size = 0x4, scoped, tag = 'scoped memory for compress_matrix_network.1']
    #allocation4 [shape = 'u8[98304]{0}', space=vmem, size = 0x18000, scoped, tag = 'input window, operand 3, single buffered']
    #allocation5 [shape = 's32[1]{0}', space=sflag, size = 0x4, scoped, tag = 'scoped memory for compress_matrix_network.1']
    #allocation6 [shape = 'u8[512]{0}', space=vmem, size = 0x400, scoped, tag = 'input window, operand 4, single buffered']
    #allocation7 [shape = 'u8[32768]{0}', space=vmem, size = 0x8000, scoped, tag = 'input window, operand 5, single buffered']
    #allocation8 [shape = 's32[1]{0}', space=sflag, size = 0x4, scoped, tag = 'scoped memory for compress_matrix_network.1']
    #allocation9 [shape = 'u8[512]{0}', space=vmem, size = 0x400, scoped, tag = 'input window, operand 6, single buffered']
    #allocation10 [shape = 'u8[512]{0}', space=vmem, size = 0x400, scoped, tag = 'input window, operand 8, single buffered']
    #allocation11 [shape = 's32[1]{0}', space=sflag, size = 0x4, scoped, tag = 'scoped memory for compress_matrix_network.1']
    %14 = vsyncpa [#allocation3], 0
    %15 = vsyncpa [#allocation5], 0
    %16 = vsyncpa [#allocation8], 0
    %17 = vsyncpa [#allocation11], 0
    // Predicated region
    $region2: #{compress_matrix_network.1} parent=1 // pred_check
      _
    $region3: #{compress_matrix_network.1} parent=1 // pred_check_branch
      %19 = sbr.rel (0) target = $region5
    $region4: #{compress_matrix_network.1} parent=1 // pred_region
      _
    $region5: #{compress_matrix_network.1} parent=1 // pred_fallthru
      _
    // Predicated region
    $region6: #{compress_matrix_network.1} parent=1 // pred_check
      _
    $region7: #{compress_matrix_network.1} parent=1 // pred_check_branch
      %21 = sbr.rel (0) target = $region9
    $region8: #{compress_matrix_network.1} parent=1 // pred_region
      %s23 = ssub.s32 4608, 4608
      %24 = vsyncadd [#allocation3], %s23
      %s25 = sshll.u32 [#allocation2], 4
      %s26 = int_to_ptr.vmem [resolvable:$true] %s25
      %31 = dma.hbm_to_vmem [thread:$0]  %s1, 4608, %s26, [#allocation3], 192, 192, 12
    $region9: #{compress_matrix_network.1} parent=1 // pred_fallthru
      _
    // Predicated region
    $region10: #{compress_matrix_network.1} parent=1 // pred_check
      _
    $region11: #{compress_matrix_network.1} parent=1 // pred_check_branch
      %33 = sbr.rel (0) target = $region13
    $region12: #{compress_matrix_network.1} parent=1 // pred_region
      _
    $region13: #{compress_matrix_network.1} parent=1 // pred_fallthru
      _
    // Predicated region
    $region14: #{compress_matrix_network.1} parent=1 // pred_check
      _
    $region15: #{compress_matrix_network.1} parent=1 // pred_check_branch
      %35 = sbr.rel (0) target = $region17
    $region16: #{compress_matrix_network.1} parent=1 // pred_region
      %s37 = ssub.s32 3072, 3072
      %38 = vsyncadd [#allocation5], %s37
      %s39 = sshll.u32 [#allocation4], 4
      %s40 = int_to_ptr.vmem [resolvable:$true] %s39
      %45 = dma.hbm_to_vmem [thread:$0]  %s3, 3072, %s40, [#allocation5], 64, 64, 4
    $region17: #{compress_matrix_network.1} parent=1 // pred_fallthru
      _
    // Predicated region
    $region18: #{compress_matrix_network.1} parent=1 // pred_check
      _
    $region19: #{compress_matrix_network.1} parent=1 // pred_check_branch
      %47 = sbr.rel (0) target = $region21
    $region20: #{compress_matrix_network.1} parent=1 // pred_region
      %s49 = ssub.s32 16, 16
      %50 = vsyncadd [#allocation5], %s49
      %s52 = sshll.u32 [#allocation6], 4
      %s53 = int_to_ptr.vmem [resolvable:$true] %s52
      %55 = dma.hbm_to_vmem [thread:$0]  %s4, 16, %s53, [#allocation5]
    $region21: #{compress_matrix_network.1} parent=1 // pred_fallthru
      _
    // Predicated region
    $region22: #{compress_matrix_network.1} parent=1 // pred_check
      _
    $region23: #{compress_matrix_network.1} parent=1 // pred_check_branch
      %57 = sbr.rel (0) target = $region25
    $region24: #{compress_matrix_network.1} parent=1 // pred_region
      %s59 = ssub.s32 1024, 1024
      %60 = vsyncadd [#allocation8], %s59
      %s61 = sshll.u32 [#allocation7], 4
      %s62 = int_to_ptr.vmem [resolvable:$true] %s61
      %67 = dma.hbm_to_vmem [thread:$0]  %s5, 1024, %s62, [#allocation8], 64, 64, 4
    $region25: #{compress_matrix_network.1} parent=1 // pred_fallthru
      _
    // Predicated region
    $region26: #{compress_matrix_network.1} parent=1 // pred_check
      _
    $region27: #{compress_matrix_network.1} parent=1 // pred_check_branch
      %69 = sbr.rel (0) target = $region29
    $region28: #{compress_matrix_network.1} parent=1 // pred_region
      %s71 = ssub.s32 16, 16
      %72 = vsyncadd [#allocation8], %s71
      %s74 = sshll.u32 [#allocation9], 4
      %s75 = int_to_ptr.vmem [resolvable:$true] %s74
      %77 = dma.hbm_to_vmem [thread:$0]  %s6, 16, %s75, [#allocation8]
    $region29: #{compress_matrix_network.1} parent=1 // pred_fallthru
      _
    // Predicated region
    $region30: #{compress_matrix_network.1} parent=1 // pred_check
      _
    $region31: #{compress_matrix_network.1} parent=1 // pred_check_branch
      %79 = sbr.rel (0) target = $region33
    $region32: #{compress_matrix_network.1} parent=1 // pred_region
      _
    $region33: #{compress_matrix_network.1} parent=1 // pred_fallthru
      _
    // Predicated region
    $region34: #{compress_matrix_network.1} parent=1 // pred_check
      _
    $region35: #{compress_matrix_network.1} parent=1 // pred_check_branch
      %81 = sbr.rel (0) target = $region37
    $region36: #{compress_matrix_network.1} parent=1 // pred_region
      %s83 = ssub.s32 16, 16
      %84 = vsyncadd [#allocation11], %s83
      %s86 = sshll.u32 [#allocation10], 4
      %s87 = int_to_ptr.vmem [resolvable:$true] %s86
      %89 = dma.hbm_to_vmem [thread:$0]  %s8, 16, %s87, [#allocation11]
    $region37: #{compress_matrix_network.1} parent=1 // pred_fallthru
      _
    // Predicated region
    $region38: #{compress_matrix_network.1} parent=1 // pred_check
      _
    $region39: #{compress_matrix_network.1} parent=1 // pred_check_branch
      %91 = sbr.rel (0) target = $region41
    $region40: #{compress_matrix_network.1} parent=1 // pred_region
      %92 = dma.done [#allocation3], 4608
    $region41: #{compress_matrix_network.1} parent=1 // pred_fallthru
      _
    // Predicated region
    $region42: #{compress_matrix_network.1} parent=1 // pred_check
      _
    $region43: #{compress_matrix_network.1} parent=1 // pred_check_branch
      %94 = sbr.rel (0) target = $region45
    $region44: #{compress_matrix_network.1} parent=1 // pred_region
      %95 = dma.done [#allocation5], 3072
    $region45: #{compress_matrix_network.1} parent=1 // pred_fallthru
      _
    // Predicated region
    $region46: #{compress_matrix_network.1} parent=1 // pred_check
      _
    $region47: #{compress_matrix_network.1} parent=1 // pred_check_branch
      %97 = sbr.rel (0) target = $region49
    $region48: #{compress_matrix_network.1} parent=1 // pred_region
      %98 = dma.done [#allocation5], 16
    $region49: #{compress_matrix_network.1} parent=1 // pred_fallthru
      _
    // Predicated region
    $region50: #{compress_matrix_network.1} parent=1 // pred_check
      _
    $region51: #{compress_matrix_network.1} parent=1 // pred_check_branch
      %100 = sbr.rel (0) target = $region53
    $region52: #{compress_matrix_network.1} parent=1 // pred_region
      %101 = dma.done [#allocation8], 1024
    $region53: #{compress_matrix_network.1} parent=1 // pred_fallthru
      _
    // Predicated region
    $region54: #{compress_matrix_network.1} parent=1 // pred_check
      _
    $region55: #{compress_matrix_network.1} parent=1 // pred_check_branch
      %103 = sbr.rel (0) target = $region57
    $region56: #{compress_matrix_network.1} parent=1 // pred_region
      %104 = dma.done [#allocation8], 16
    $region57: #{compress_matrix_network.1} parent=1 // pred_fallthru
      _
    // Predicated region
    $region58: #{compress_matrix_network.1} parent=1 // pred_check
      _
    $region59: #{compress_matrix_network.1} parent=1 // pred_check_branch
      %106 = sbr.rel (0) target = $region61
    $region60: #{compress_matrix_network.1} parent=1 // pred_region
      %107 = dma.done [#allocation11], 16
    $region61: #{compress_matrix_network.1} parent=1 // pred_fallthru
      _
    %v109 = vld [vmem:[%s0] sm:$0xff]
    %v110 = vld [vmem:[%s0 + $0x8] sm:$0xff]
    %v111 = vld [vmem:[%s0 + $0x10] sm:$0xff]
    %v112 = vld [vmem:[%s0 + $0x18] sm:$0xff]
    %v113 = vpack.c.bf16 %v111, %v109
    %v114 = vpack.c.bf16 %v112, %v110
    %v115 = vld [vmem:[#allocation2] sm:$0xff]
    %v116 = vld [vmem:[#allocation2 + $0x8] sm:$0xf]
    %v117 = vld [vmem:[#allocation2 + $0xc] sm:$0xff]
    %v118 = vld [vmem:[#allocation2 + $0x14] sm:$0xf]
    %v119 = vld [vmem:[#allocation2 + $0x18] sm:$0xff]
    %v120 = vld [vmem:[#allocation2 + $0x20] sm:$0xf]
    %v121 = vld [vmem:[#allocation2 + $0x24] sm:$0xff]
    %v122 = vld [vmem:[#allocation2 + $0x2c] sm:$0xf]
    %v123 = vld [vmem:[#allocation2 + $0x30] sm:$0xff]
    %v124 = vld [vmem:[#allocation2 + $0x38] sm:$0xf]
    %v125 = vld [vmem:[#allocation2 + $0x3c] sm:$0xff]
    %v126 = vld [vmem:[#allocation2 + $0x44] sm:$0xf]
    %v127 = vld [vmem:[#allocation2 + $0x48] sm:$0xff]
    %v128 = vld [vmem:[#allocation2 + $0x50] sm:$0xf]
    %v129 = vld [vmem:[#allocation2 + $0x54] sm:$0xff]
    %v130 = vld [vmem:[#allocation2 + $0x5c] sm:$0xf]
    %v131 = vld [vmem:[#allocation2 + $0x60] sm:$0xff]
    %v132 = vld [vmem:[#allocation2 + $0x68] sm:$0xf]
    %v133 = vld [vmem:[#allocation2 + $0x6c] sm:$0xff]
    %v134 = vld [vmem:[#allocation2 + $0x74] sm:$0xf]
    %v135 = vld [vmem:[#allocation2 + $0x78] sm:$0xff]
    %v136 = vld [vmem:[#allocation2 + $0x80] sm:$0xf]
    %v137 = vld [vmem:[#allocation2 + $0x84] sm:$0xff]
    %v138 = vld [vmem:[#allocation2 + $0x8c] sm:$0xf]
    %v139 = vld [vmem:[#allocation2 + $0x90] sm:$0xff]
    %v140 = vld [vmem:[#allocation2 + $0x98] sm:$0xf]
    %v141 = vld [vmem:[#allocation2 + $0x9c] sm:$0xff]
    %v142 = vld [vmem:[#allocation2 + $0xa4] sm:$0xf]
    %v143 = vld [vmem:[#allocation2 + $0xa8] sm:$0xff]
    %v144 = vld [vmem:[#allocation2 + $0xb0] sm:$0xf]
    %v145 = vld [vmem:[#allocation2 + $0xb4] sm:$0xff]
    %v146 = vld [vmem:[#allocation2 + $0xbc] sm:$0xf]
    %v147 = vld [vmem:[#allocation2 + $0xc0] sm:$0xff]
    %v148 = vld [vmem:[#allocation2 + $0xc8] sm:$0xf]
    %v149 = vld [vmem:[#allocation2 + $0xcc] sm:$0xff]
    %v150 = vld [vmem:[#allocation2 + $0xd4] sm:$0xf]
    %v151 = vld [vmem:[#allocation2 + $0xd8] sm:$0xff]
    %v152 = vld [vmem:[#allocation2 + $0xe0] sm:$0xf]
    %v153 = vld [vmem:[#allocation2 + $0xe4] sm:$0xff]
    %v154 = vld [vmem:[#allocation2 + $0xec] sm:$0xf]
    %v155 = vld [vmem:[#allocation2 + $0xf0] sm:$0xff]
    %v156 = vld [vmem:[#allocation2 + $0xf8] sm:$0xf]
    %v157 = vld [vmem:[#allocation2 + $0xfc] sm:$0xff]
    %v158 = vld [vmem:[#allocation2 + $0x104] sm:$0xf]
    %v159 = vld [vmem:[#allocation2 + $0x108] sm:$0xff]
    %v160 = vld [vmem:[#allocation2 + $0x110] sm:$0xf]
    %v161 = vld [vmem:[#allocation2 + $0x114] sm:$0x77]
    %v162 = vld [vmem:[#allocation2 + $0x11c] sm:$0x7]
    %v163 = vld [vmem:[%s2] sm:$0x7]
    %v165 = vlaneseq
    %v166 = vshrl.u32 %v165, 7
    %v167 = vsub.s32 0, %v166
    %v168 = vrot.slane %v163, %v167
    %v169 = vlaneseq
    %v170 = vshrl.u32 %v169, 7
    %v171 = vsub.s32 1, %v170
    %v172 = vrot.slane %v163, %v171
    %v173 = vlaneseq
    %v174 = vshrl.u32 %v173, 7
    %v175 = vsub.s32 2, %v174
    %v176 = vrot.slane %v163, %v175
    %v228 = vunpack.c.l.b16 %v115
    %v229 = vunpack.c.h.b16 %v115
    %v230 = vunpack.c.l.b16 %v116
    %v231 = vunpack.c.l.b16 %v117
    %v232 = vunpack.c.h.b16 %v117
    %v233 = vunpack.c.l.b16 %v118
    %v234 = vunpack.c.l.b16 %v119
    %v235 = vunpack.c.h.b16 %v119
    %v236 = vunpack.c.l.b16 %v120
    %v237 = vunpack.c.l.b16 %v121
    %v238 = vunpack.c.h.b16 %v121
    %v239 = vunpack.c.l.b16 %v122
    %v240 = vunpack.c.l.b16 %v123
    %v241 = vunpack.c.h.b16 %v123
    %v242 = vunpack.c.l.b16 %v124
    %v243 = vunpack.c.l.b16 %v125
    %v244 = vunpack.c.h.b16 %v125
    %v245 = vunpack.c.l.b16 %v126
    %v246 = vunpack.c.l.b16 %v127
    %v247 = vunpack.c.h.b16 %v127
    %v248 = vunpack.c.l.b16 %v128
    %v249 = vunpack.c.l.b16 %v129
    %v250 = vunpack.c.h.b16 %v129
    %v251 = vunpack.c.l.b16 %v130
    %v252 = vunpack.c.l.b16 %v131
    %v253 = vunpack.c.h.b16 %v131
    %v254 = vunpack.c.l.b16 %v132
    %v255 = vunpack.c.l.b16 %v133
    %v256 = vunpack.c.h.b16 %v133
    %v257 = vunpack.c.l.b16 %v134
    %v258 = vunpack.c.l.b16 %v135
    %v259 = vunpack.c.h.b16 %v135
    %v260 = vunpack.c.l.b16 %v136
    %v261 = vunpack.c.l.b16 %v137
    %v262 = vunpack.c.h.b16 %v137
    %v263 = vunpack.c.l.b16 %v138
    %v264 = vunpack.c.l.b16 %v139
    %v265 = vunpack.c.h.b16 %v139
    %v266 = vunpack.c.l.b16 %v140
    %v267 = vunpack.c.l.b16 %v141
    %v268 = vunpack.c.h.b16 %v141
    %v269 = vunpack.c.l.b16 %v142
    %v270 = vunpack.c.l.b16 %v143
    %v271 = vunpack.c.h.b16 %v143
    %v272 = vunpack.c.l.b16 %v144
    %v273 = vunpack.c.l.b16 %v145
    %v274 = vunpack.c.h.b16 %v145
    %v275 = vunpack.c.l.b16 %v146
    %v276 = vunpack.c.l.b16 %v147
    %v277 = vunpack.c.h.b16 %v147
    %v278 = vunpack.c.l.b16 %v148
    %v279 = vunpack.c.l.b16 %v149
    %v280 = vunpack.c.h.b16 %v149
    %v281 = vunpack.c.l.b16 %v150
    %v282 = vunpack.c.l.b16 %v151
    %v283 = vunpack.c.h.b16 %v151
    %v284 = vunpack.c.l.b16 %v152
    %v285 = vunpack.c.l.b16 %v153
    %v286 = vunpack.c.h.b16 %v153
    %v287 = vunpack.c.l.b16 %v154
    %v288 = vunpack.c.l.b16 %v155
    %v289 = vunpack.c.h.b16 %v155
    %v290 = vunpack.c.l.b16 %v156
    %v291 = vunpack.c.l.b16 %v157
    %v292 = vunpack.c.h.b16 %v157
    %v293 = vunpack.c.l.b16 %v158
    %v294 = vunpack.c.l.b16 %v159
    %v295 = vunpack.c.h.b16 %v159
    %v296 = vunpack.c.l.b16 %v160
    %v297 = vunpack.c.l.b16 %v161
    %v298 = vunpack.c.h.b16 %v161
    %v299 = vunpack.c.l.b16 %v162
    %v300 = vpack.c.b16 %v231, %v228
    %v301 = vpack.c.b16 %v232, %v229
    %v302 = vpack.c.b16 %v233, %v230
    %v303 = vpack.c.b16 %v237, %v234
    %v304 = vpack.c.b16 %v238, %v235
    %v305 = vpack.c.b16 %v239, %v236
    %v306 = vpack.c.b16 %v243, %v240
    %v307 = vpack.c.b16 %v244, %v241
    %v308 = vpack.c.b16 %v245, %v242
    %v309 = vpack.c.b16 %v249, %v246
    %v310 = vpack.c.b16 %v250, %v247
    %v311 = vpack.c.b16 %v251, %v248
    %v312 = vpack.c.b16 %v255, %v252
    %v313 = vpack.c.b16 %v256, %v253
    %v314 = vpack.c.b16 %v257, %v254
    %v315 = vpack.c.b16 %v261, %v258
    %v316 = vpack.c.b16 %v262, %v259
    %v317 = vpack.c.b16 %v263, %v260
    %v318 = vpack.c.b16 %v267, %v264
    %v319 = vpack.c.b16 %v268, %v265
    %v320 = vpack.c.b16 %v269, %v266
    %v321 = vpack.c.b16 %v273, %v270
    %v322 = vpack.c.b16 %v274, %v271
    %v323 = vpack.c.b16 %v275, %v272
    %v324 = vpack.c.b16 %v279, %v276
    %v325 = vpack.c.b16 %v280, %v277
    %v326 = vpack.c.b16 %v281, %v278
    %v327 = vpack.c.b16 %v285, %v282
    %v328 = vpack.c.b16 %v286, %v283
    %v329 = vpack.c.b16 %v287, %v284
    %v330 = vpack.c.b16 %v291, %v288
    %v331 = vpack.c.b16 %v292, %v289
    %v332 = vpack.c.b16 %v293, %v290
    %v333 = vpack.c.b16 %v297, %v294
    %v334 = vpack.c.b16 %v298, %v295
    %v335 = vpack.c.b16 %v299, %v296
    %vm369 = vcmask 506880
    %v371 = vsel %vm369, %v114, 0
    %vm373 = vcmask 1046528
    %v375 = vsel %vm373, %v333, 0
    %v378 = vsel %vm373, %v334, 0
    %v381 = vsel %vm373, %v335, 0
    %383 = vmatprep.subr.bf16.mxu0 %v301
    %384 = vmatpush1.bf16.msra.mxu0 %v300
    %385 = vmatprep.subr.bf16.mxu0 %v304
    %386 = vmatpush1.bf16.msra.mxu0 %v303
    %387 = vmatprep.subr.bf16.mxu0 %v307
    %388 = vmatpush1.bf16.msra.mxu0 %v306
    %389 = vmatprep.subr.bf16.mxu0 %v310
    %390 = vmatpush1.bf16.msra.mxu0 %v309
    %391 = vmatprep.subr.bf16.mxu0 %v313
    %392 = vmatpush1.bf16.msra.mxu0 %v312
    %393 = vmatprep.subr.bf16.mxu0 %v316
    %394 = vmatpush1.bf16.msra.mxu0 %v315
    %395 = vmatprep.subr.bf16.mxu0 %v319
    %396 = vmatpush1.bf16.msra.mxu0 %v318
    %397 = vmatprep.subr.bf16.mxu0 %v322
    %398 = vmatpush1.bf16.msra.mxu0 %v321
    %399 = vmatprep.subr.bf16.mxu0 %v325
    %400 = vmatpush1.bf16.msra.mxu0 %v324
    %401 = vmatprep.subr.bf16.mxu0 %v328
    %402 = vmatpush1.bf16.msra.mxu0 %v327
    %403 = vmatprep.subr.bf16.mxu0 %v331
    %404 = vmatpush1.bf16.msra.mxu0 %v330
    %405 = vmatprep.subr.bf16.mxu0 %v378
    %406 = vmatpush1.bf16.msra.mxu0 %v375
    %407 = vmatprep.subr.bf16.mxu0 0
    %408 = vmatpush1.bf16.msra.mxu0 0
    %409 = vmatprep.subr.bf16.mxu0 0
    %410 = vmatpush1.bf16.msra.mxu0 0
    %411 = vmatprep.subr.bf16.mxu0 0
    %412 = vmatpush1.bf16.msra.mxu0 0
    %413 = vmatprep.subr.bf16.mxu0 0
    %414 = vmatpush1.bf16.msra.mxu0 0
    %415 = vmatprep.mubr.bf16.mxu0 %v371
    %416 = vmatmul.mubr.bf16.gmra.mrb[0].mxu0 %v113
    %v417 = vpop.f32.mrb[0].mxu0
    %v418 = vadd.f32 %v168, %v417
    %v419 = vpop.f32.mrb[0].mxu0
    %v420 = vadd.f32 %v172, %v419
    %v421 = vpop.f32.mrb[0].mxu0
    %v422 = vadd.f32 %v168, %v421
    %v423 = vpop.f32.mrb[0].mxu0
    %v424 = vadd.f32 %v172, %v423
    %425 = vdwg.mxu0
    %426 = vmatprep.subr.bf16.mxu0 0
    %427 = vmatpush1.bf16.msra.mxu0 %v302
    %428 = vmatprep.subr.bf16.mxu0 0
    %429 = vmatpush1.bf16.msra.mxu0 %v305
    %430 = vmatprep.subr.bf16.mxu0 0
    %431 = vmatpush1.bf16.msra.mxu0 %v308
    %432 = vmatprep.subr.bf16.mxu0 0
    %433 = vmatpush1.bf16.msra.mxu0 %v311
    %434 = vmatprep.subr.bf16.mxu0 0
    %435 = vmatpush1.bf16.msra.mxu0 %v314
    %436 = vmatprep.subr.bf16.mxu0 0
    %437 = vmatpush1.bf16.msra.mxu0 %v317
    %438 = vmatprep.subr.bf16.mxu0 0
    %439 = vmatpush1.bf16.msra.mxu0 %v320
    %440 = vmatprep.subr.bf16.mxu0 0
    %441 = vmatpush1.bf16.msra.mxu0 %v323
    %442 = vmatprep.subr.bf16.mxu0 0
    %443 = vmatpush1.bf16.msra.mxu0 %v326
    %444 = vmatprep.subr.bf16.mxu0 0
    %445 = vmatpush1.bf16.msra.mxu0 %v329
    %446 = vmatprep.subr.bf16.mxu0 0
    %447 = vmatpush1.bf16.msra.mxu0 %v332
    %448 = vmatprep.subr.bf16.mxu0 0
    %449 = vmatpush1.bf16.msra.mxu0 %v381
    %450 = vmatprep.subr.bf16.mxu0 0
    %451 = vmatpush1.bf16.msra.mxu0 0
    %452 = vmatprep.subr.bf16.mxu0 0
    %453 = vmatpush1.bf16.msra.mxu0 0
    %454 = vmatprep.subr.bf16.mxu0 0
    %455 = vmatpush1.bf16.msra.mxu0 0
    %456 = vmatprep.subr.bf16.mxu0 0
    %457 = vmatpush1.bf16.msra.mxu0 0
    %458 = vmatprep.mubr.bf16.mxu0 %v371
    %459 = vmatmul.mubr.bf16.gmra.mrb[0].mxu0 %v113
    %v460 = vpop.f32.mrb[0].mxu0
    %v461 = vadd.f32 %v176, %v460
    %v462 = vpop.f32.mrb[0].mxu0
    %v463 = vpop.f32.mrb[0].mxu0
    %v464 = vadd.f32 %v176, %v463
    %v465 = vpop.f32.mrb[0].mxu0
    %466 = vdwg.mxu0
    %v467 = vmax.f32 %v418, 0.0
    %v468 = vmax.f32 %v420, 0.0
    %v469 = vmax.f32 %v461, 0.0
    %v470 = vmax.f32 %v422, 0.0
    %v471 = vmax.f32 %v424, 0.0
    %v472 = vmax.f32 %v464, 0.0
    %v473 = vpack.c.bf16 %v470, %v467
    %v474 = vpack.c.bf16 %v471, %v468
    %v475 = vpack.c.bf16 %v472, %v469
    %v476 = vld [vmem:[#allocation4] sm:$0xf]
    %v477 = vld [vmem:[#allocation4 + $0x4] sm:$0xf]
    %v478 = vld [vmem:[#allocation4 + $0x8] sm:$0xf]
    %v479 = vld [vmem:[#allocation4 + $0xc] sm:$0xf]
    %v480 = vld [vmem:[#allocation4 + $0x10] sm:$0xf]
    %v481 = vld [vmem:[#allocation4 + $0x14] sm:$0xf]
    %v482 = vld [vmem:[#allocation4 + $0x18] sm:$0xf]
    %v483 = vld [vmem:[#allocation4 + $0x1c] sm:$0xf]
    %v484 = vld [vmem:[#allocation4 + $0x20] sm:$0xf]
    %v485 = vld [vmem:[#allocation4 + $0x24] sm:$0xf]
    %v486 = vld [vmem:[#allocation4 + $0x28] sm:$0xf]
    %v487 = vld [vmem:[#allocation4 + $0x2c] sm:$0xf]
    %v488 = vld [vmem:[#allocation4 + $0x30] sm:$0xf]
    %v489 = vld [vmem:[#allocation4 + $0x34] sm:$0xf]
    %v490 = vld [vmem:[#allocation4 + $0x38] sm:$0xf]
    %v491 = vld [vmem:[#allocation4 + $0x3c] sm:$0xf]
    %v492 = vld [vmem:[#allocation4 + $0x40] sm:$0xf]
    %v493 = vld [vmem:[#allocation4 + $0x44] sm:$0xf]
    %v494 = vld [vmem:[#allocation4 + $0x48] sm:$0xf]
    %v495 = vld [vmem:[#allocation4 + $0x4c] sm:$0xf]
    %v496 = vld [vmem:[#allocation4 + $0x50] sm:$0xf]
    %v497 = vld [vmem:[#allocation4 + $0x54] sm:$0xf]
    %v498 = vld [vmem:[#allocation4 + $0x58] sm:$0xf]
    %v499 = vld [vmem:[#allocation4 + $0x5c] sm:$0xf]
    %v500 = vld [vmem:[#allocation4 + $0x60] sm:$0xf]
    %v501 = vld [vmem:[#allocation4 + $0x64] sm:$0xf]
    %v502 = vld [vmem:[#allocation4 + $0x68] sm:$0xf]
    %v503 = vld [vmem:[#allocation4 + $0x6c] sm:$0xf]
    %v504 = vld [vmem:[#allocation4 + $0x70] sm:$0xf]
    %v505 = vld [vmem:[#allocation4 + $0x74] sm:$0xf]
    %v506 = vld [vmem:[#allocation4 + $0x78] sm:$0xf]
    %v507 = vld [vmem:[#allocation4 + $0x7c] sm:$0xf]
    %v508 = vld [vmem:[#allocation4 + $0x80] sm:$0xf]
    %v509 = vld [vmem:[#allocation4 + $0x84] sm:$0xf]
    %v510 = vld [vmem:[#allocation4 + $0x88] sm:$0xf]
    %v511 = vld [vmem:[#allocation4 + $0x8c] sm:$0xf]
    %v512 = vld [vmem:[#allocation4 + $0x90] sm:$0xf]
    %v513 = vld [vmem:[#allocation4 + $0x94] sm:$0xf]
    %v514 = vld [vmem:[#allocation4 + $0x98] sm:$0xf]
    %v515 = vld [vmem:[#allocation4 + $0x9c] sm:$0xf]
    %v516 = vld [vmem:[#allocation4 + $0xa0] sm:$0xf]
    %v517 = vld [vmem:[#allocation4 + $0xa4] sm:$0xf]
    %v518 = vld [vmem:[#allocation4 + $0xa8] sm:$0xf]
    %v519 = vld [vmem:[#allocation4 + $0xac] sm:$0xf]
    %v520 = vld [vmem:[#allocation4 + $0xb0] sm:$0xf]
    %v521 = vld [vmem:[#allocation4 + $0xb4] sm:$0xf]
    %v522 = vld [vmem:[#allocation4 + $0xb8] sm:$0xf]
    %v523 = vld [vmem:[#allocation4 + $0xbc] sm:$0xf]
    %v524 = vld [vmem:[#allocation6] sm:$0x1]
    %v526 = vlaneseq
    %v527 = vshrl.u32 %v526, 7
    %v528 = vsub.s32 0, %v527
    %v529 = vrot.slane %v524, %v528
    %v579 = vunpack.c.l.b16 %v476
    %v580 = vunpack.c.l.b16 %v477
    %v581 = vunpack.c.l.b16 %v478
    %v582 = vunpack.c.l.b16 %v479
    %v583 = vunpack.c.l.b16 %v480
    %v584 = vunpack.c.l.b16 %v481
    %v585 = vunpack.c.l.b16 %v482
    %v586 = vunpack.c.l.b16 %v483
    %v587 = vunpack.c.l.b16 %v484
    %v588 = vunpack.c.l.b16 %v485
    %v589 = vunpack.c.l.b16 %v486
    %v590 = vunpack.c.l.b16 %v487
    %v591 = vunpack.c.l.b16 %v488
    %v592 = vunpack.c.l.b16 %v489
    %v593 = vunpack.c.l.b16 %v490
    %v594 = vunpack.c.l.b16 %v491
    %v595 = vunpack.c.l.b16 %v492
    %v596 = vunpack.c.l.b16 %v493
    %v597 = vunpack.c.l.b16 %v494
    %v598 = vunpack.c.l.b16 %v495
    %v599 = vunpack.c.l.b16 %v496
    %v600 = vunpack.c.l.b16 %v497
    %v601 = vunpack.c.l.b16 %v498
    %v602 = vunpack.c.l.b16 %v499
    %v603 = vunpack.c.l.b16 %v500
    %v604 = vunpack.c.l.b16 %v501
    %v605 = vunpack.c.l.b16 %v502
    %v606 = vunpack.c.l.b16 %v503
    %v607 = vunpack.c.l.b16 %v504
    %v608 = vunpack.c.l.b16 %v505
    %v609 = vunpack.c.l.b16 %v506
    %v610 = vunpack.c.l.b16 %v507
    %v611 = vunpack.c.l.b16 %v508
    %v612 = vunpack.c.l.b16 %v509
    %v613 = vunpack.c.l.b16 %v510
    %v614 = vunpack.c.l.b16 %v511
    %v615 = vunpack.c.l.b16 %v512
    %v616 = vunpack.c.l.b16 %v513
    %v617 = vunpack.c.l.b16 %v514
    %v618 = vunpack.c.l.b16 %v515
    %v619 = vunpack.c.l.b16 %v516
    %v620 = vunpack.c.l.b16 %v517
    %v621 = vunpack.c.l.b16 %v518
    %v622 = vunpack.c.l.b16 %v519
    %v623 = vunpack.c.l.b16 %v520
    %v624 = vunpack.c.l.b16 %v521
    %v625 = vunpack.c.l.b16 %v522
    %v626 = vunpack.c.l.b16 %v523
    %v627 = vpack.c.b16 %v580, %v579
    %v628 = vpack.c.b16 %v582, %v581
    %v629 = vpack.c.b16 %v584, %v583
    %v630 = vpack.c.b16 %v586, %v585
    %v631 = vpack.c.b16 %v588, %v587
    %v632 = vpack.c.b16 %v590, %v589
    %v633 = vpack.c.b16 %v592, %v591
    %v634 = vpack.c.b16 %v594, %v593
    %v635 = vpack.c.b16 %v596, %v595
    %v636 = vpack.c.b16 %v598, %v597
    %v637 = vpack.c.b16 %v600, %v599
    %v638 = vpack.c.b16 %v602, %v601
    %v639 = vpack.c.b16 %v604, %v603
    %v640 = vpack.c.b16 %v606, %v605
    %v641 = vpack.c.b16 %v608, %v607
    %v642 = vpack.c.b16 %v610, %v609
    %v643 = vpack.c.b16 %v612, %v611
    %v644 = vpack.c.b16 %v614, %v613
    %v645 = vpack.c.b16 %v616, %v615
    %v646 = vpack.c.b16 %v618, %v617
    %v647 = vpack.c.b16 %v620, %v619
    %v648 = vpack.c.b16 %v622, %v621
    %v649 = vpack.c.b16 %v624, %v623
    %v650 = vpack.c.b16 %v626, %v625
    %675 = vmatprep.subr.bf16.mxu0 0
    %676 = vmatpush1.bf16.msra.mxu0 %v627
    %677 = vmatprep.subr.bf16.mxu0 0
    %678 = vmatpush1.bf16.msra.mxu0 %v628
    %679 = vmatprep.subr.bf16.mxu0 0
    %680 = vmatpush1.bf16.msra.mxu0 %v629
    %681 = vmatprep.subr.bf16.mxu0 0
    %682 = vmatpush1.bf16.msra.mxu0 %v630
    %683 = vmatprep.subr.bf16.mxu0 0
    %684 = vmatpush1.bf16.msra.mxu0 %v631
    %685 = vmatprep.subr.bf16.mxu0 0
    %686 = vmatpush1.bf16.msra.mxu0 %v632
    %687 = vmatprep.subr.bf16.mxu0 0
    %688 = vmatpush1.bf16.msra.mxu0 %v633
    %689 = vmatprep.subr.bf16.mxu0 0
    %690 = vmatpush1.bf16.msra.mxu0 %v634
    %691 = vmatprep.subr.bf16.mxu0 0
    %692 = vmatpush1.bf16.msra.mxu0 %v635
    %693 = vmatprep.subr.bf16.mxu0 0
    %694 = vmatpush1.bf16.msra.mxu0 %v636
    %695 = vmatprep.subr.bf16.mxu0 0
    %696 = vmatpush1.bf16.msra.mxu0 %v637
    %697 = vmatprep.subr.bf16.mxu0 0
    %698 = vmatpush1.bf16.msra.mxu0 %v638
    %699 = vmatprep.subr.bf16.mxu0 0
    %700 = vmatpush1.bf16.msra.mxu0 %v639
    %701 = vmatprep.subr.bf16.mxu0 0
    %702 = vmatpush1.bf16.msra.mxu0 %v640
    %703 = vmatprep.subr.bf16.mxu0 0
    %704 = vmatpush1.bf16.msra.mxu0 %v641
    %705 = vmatprep.subr.bf16.mxu0 0
    %706 = vmatpush1.bf16.msra.mxu0 %v642
    %707 = vmatprep.mubr.bf16.mxu0 %v474
    %708 = vmatmul.mubr.bf16.gmra.mrb[0].mxu0 %v473
    %v709 = vpop.f32.mrb[0].mxu0
    %v710 = vadd.f32 %v529, %v709
    %v711 = vpop.f32.mrb[0].mxu0
    %v712 = vpop.f32.mrb[0].mxu0
    %v713 = vadd.f32 %v529, %v712
    %v714 = vpop.f32.mrb[0].mxu0
    %715 = vdwg.mxu0
    %716 = vmatprep.subr.bf16.mxu0 0
    %717 = vmatpush1.bf16.msra.mxu0 %v643
    %718 = vmatprep.subr.bf16.mxu0 0
    %719 = vmatpush1.bf16.msra.mxu0 %v644
    %720 = vmatprep.subr.bf16.mxu0 0
    %721 = vmatpush1.bf16.msra.mxu0 %v645
    %722 = vmatprep.subr.bf16.mxu0 0
    %723 = vmatpush1.bf16.msra.mxu0 %v646
    %724 = vmatprep.subr.bf16.mxu0 0
    %725 = vmatpush1.bf16.msra.mxu0 %v647
    %726 = vmatprep.subr.bf16.mxu0 0
    %727 = vmatpush1.bf16.msra.mxu0 %v648
    %728 = vmatprep.subr.bf16.mxu0 0
    %729 = vmatpush1.bf16.msra.mxu0 %v649
    %730 = vmatprep.subr.bf16.mxu0 0
    %731 = vmatpush1.bf16.msra.mxu0 %v650
    %732 = vmatprep.subr.bf16.mxu0 0
    %733 = vmatpush1.bf16.msra.mxu0 0
    %734 = vmatprep.subr.bf16.mxu0 0
    %735 = vmatpush1.bf16.msra.mxu0 0
    %736 = vmatprep.subr.bf16.mxu0 0
    %737 = vmatpush1.bf16.msra.mxu0 0
    %738 = vmatprep.subr.bf16.mxu0 0
    %739 = vmatpush1.bf16.msra.mxu0 0
    %740 = vmatprep.subr.bf16.mxu0 0
    %741 = vmatpush1.bf16.msra.mxu0 0
    %742 = vmatprep.subr.bf16.mxu0 0
    %743 = vmatpush1.bf16.msra.mxu0 0
    %744 = vmatprep.subr.bf16.mxu0 0
    %745 = vmatpush1.bf16.msra.mxu0 0
    %746 = vmatprep.subr.bf16.mxu0 0
    %747 = vmatpush1.bf16.msra.mxu0 0
    %748 = vmatprep.mubr.bf16.mxu0 0
    %749 = vmatmul.mubr.bf16.gmra.mrb[0].mxu0 %v475
    %v750 = vpop.f32.mrb[0].mxu0
    %v751 = vadd.f32 %v710, %v750
    %v752 = vpop.f32.mrb[0].mxu0
    %v753 = vpop.f32.mrb[0].mxu0
    %v754 = vadd.f32 %v713, %v753
    %v755 = vpop.f32.mrb[0].mxu0
    %756 = vdwg.mxu0
    %v757 = vmax.f32 %v751, 0.0
    %v758 = vmax.f32 %v754, 0.0
    %v759 = vpack.c.bf16 %v758, %v757
    %v760 = vld [vmem:[#allocation7] sm:$0xf]
    %v761 = vld [vmem:[#allocation7 + $0x4] sm:$0xf]
    %v762 = vld [vmem:[#allocation7 + $0x8] sm:$0xf]
    %v763 = vld [vmem:[#allocation7 + $0xc] sm:$0xf]
    %v764 = vld [vmem:[#allocation7 + $0x10] sm:$0xf]
    %v765 = vld [vmem:[#allocation7 + $0x14] sm:$0xf]
    %v766 = vld [vmem:[#allocation7 + $0x18] sm:$0xf]
    %v767 = vld [vmem:[#allocation7 + $0x1c] sm:$0xf]
    %v768 = vld [vmem:[#allocation7 + $0x20] sm:$0xf]
    %v769 = vld [vmem:[#allocation7 + $0x24] sm:$0xf]
    %v770 = vld [vmem:[#allocation7 + $0x28] sm:$0xf]
    %v771 = vld [vmem:[#allocation7 + $0x2c] sm:$0xf]
    %v772 = vld [vmem:[#allocation7 + $0x30] sm:$0xf]
    %v773 = vld [vmem:[#allocation7 + $0x34] sm:$0xf]
    %v774 = vld [vmem:[#allocation7 + $0x38] sm:$0xf]
    %v775 = vld [vmem:[#allocation7 + $0x3c] sm:$0xf]
    %v776 = vld [vmem:[#allocation9] sm:$0x1]
    %v778 = vlaneseq
    %v779 = vshrl.u32 %v778, 7
    %v780 = vsub.s32 0, %v779
    %v781 = vrot.slane %v776, %v780
    %v799 = vunpack.c.l.b16 %v760
    %v800 = vunpack.c.l.b16 %v761
    %v801 = vunpack.c.l.b16 %v762
    %v802 = vunpack.c.l.b16 %v763
    %v803 = vunpack.c.l.b16 %v764
    %v804 = vunpack.c.l.b16 %v765
    %v805 = vunpack.c.l.b16 %v766
    %v806 = vunpack.c.l.b16 %v767
    %v807 = vunpack.c.l.b16 %v768
    %v808 = vunpack.c.l.b16 %v769
    %v809 = vunpack.c.l.b16 %v770
    %v810 = vunpack.c.l.b16 %v771
    %v811 = vunpack.c.l.b16 %v772
    %v812 = vunpack.c.l.b16 %v773
    %v813 = vunpack.c.l.b16 %v774
    %v814 = vunpack.c.l.b16 %v775
    %v815 = vpack.c.b16 %v800, %v799
    %v816 = vpack.c.b16 %v802, %v801
    %v817 = vpack.c.b16 %v804, %v803
    %v818 = vpack.c.b16 %v806, %v805
    %v819 = vpack.c.b16 %v808, %v807
    %v820 = vpack.c.b16 %v810, %v809
    %v821 = vpack.c.b16 %v812, %v811
    %v822 = vpack.c.b16 %v814, %v813
    %831 = vmatprep.subr.bf16.mxu0 0
    %832 = vmatpush1.bf16.msra.mxu0 %v815
    %833 = vmatprep.subr.bf16.mxu0 0
    %834 = vmatpush1.bf16.msra.mxu0 %v816
    %835 = vmatprep.subr.bf16.mxu0 0
    %836 = vmatpush1.bf16.msra.mxu0 %v817
    %837 = vmatprep.subr.bf16.mxu0 0
    %838 = vmatpush1.bf16.msra.mxu0 %v818
    %839 = vmatprep.subr.bf16.mxu0 0
    %840 = vmatpush1.bf16.msra.mxu0 %v819
    %841 = vmatprep.subr.bf16.mxu0 0
    %842 = vmatpush1.bf16.msra.mxu0 %v820
    %843 = vmatprep.subr.bf16.mxu0 0
    %844 = vmatpush1.bf16.msra.mxu0 %v821
    %845 = vmatprep.subr.bf16.mxu0 0
    %846 = vmatpush1.bf16.msra.mxu0 %v822
    %847 = vmatprep.subr.bf16.mxu0 0
    %848 = vmatpush1.bf16.msra.mxu0 0
    %849 = vmatprep.subr.bf16.mxu0 0
    %850 = vmatpush1.bf16.msra.mxu0 0
    %851 = vmatprep.subr.bf16.mxu0 0
    %852 = vmatpush1.bf16.msra.mxu0 0
    %853 = vmatprep.subr.bf16.mxu0 0
    %854 = vmatpush1.bf16.msra.mxu0 0
    %855 = vmatprep.subr.bf16.mxu0 0
    %856 = vmatpush1.bf16.msra.mxu0 0
    %857 = vmatprep.subr.bf16.mxu0 0
    %858 = vmatpush1.bf16.msra.mxu0 0
    %859 = vmatprep.subr.bf16.mxu0 0
    %860 = vmatpush1.bf16.msra.mxu0 0
    %861 = vmatprep.subr.bf16.mxu0 0
    %862 = vmatpush1.bf16.msra.mxu0 0
    %863 = vmatprep.mubr.bf16.mxu0 0
    %864 = vmatmul.mubr.bf16.gmra.mrb[0].mxu0 %v759
    %v865 = vpop.f32.mrb[0].mxu0
    %v866 = vadd.f32 %v781, %v865
    %v867 = vpop.f32.mrb[0].mxu0
    %v868 = vpop.f32.mrb[0].mxu0
    %v869 = vadd.f32 %v781, %v868
    %v870 = vpop.f32.mrb[0].mxu0
    %871 = vdwg.mxu0
    %v872 = vmax.f32 %v866, 0.0
    %v873 = vmax.f32 %v869, 0.0
    %v874 = vpack.c.bf16 %v873, %v872
    %v875 = vld [vmem:[%s7] sm:$0xf]
    %v876 = vld [vmem:[%s7 + $0x4] sm:$0xf]
    %v877 = vld [vmem:[%s7 + $0x8] sm:$0xf]
    %v878 = vld [vmem:[%s7 + $0xc] sm:$0xf]
    %v879 = vld [vmem:[%s7 + $0x10] sm:$0xf]
    %v880 = vld [vmem:[%s7 + $0x14] sm:$0xf]
    %v881 = vld [vmem:[%s7 + $0x18] sm:$0xf]
    %v882 = vld [vmem:[%s7 + $0x1c] sm:$0xf]
    %v883 = vld [vmem:[%s7 + $0x20] sm:$0xf]
    %v884 = vld [vmem:[%s7 + $0x24] sm:$0xf]
    %v885 = vld [vmem:[%s7 + $0x28] sm:$0xf]
    %v886 = vld [vmem:[%s7 + $0x2c] sm:$0xf]
    %v887 = vld [vmem:[%s7 + $0x30] sm:$0xf]
    %v888 = vld [vmem:[%s7 + $0x34] sm:$0xf]
    %v889 = vld [vmem:[%s7 + $0x38] sm:$0xf]
    %v890 = vld [vmem:[%s7 + $0x3c] sm:$0xf]
    %v891 = vld [vmem:[#allocation10] sm:$0x1]
    %v893 = vlaneseq
    %v894 = vshrl.u32 %v893, 7
    %v895 = vsub.s32 0, %v894
    %v896 = vrot.slane %v891, %v895
    %v914 = vunpack.c.l.b16 %v875
    %v915 = vunpack.c.l.b16 %v876
    %v916 = vunpack.c.l.b16 %v877
    %v917 = vunpack.c.l.b16 %v878
    %v918 = vunpack.c.l.b16 %v879
    %v919 = vunpack.c.l.b16 %v880
    %v920 = vunpack.c.l.b16 %v881
    %v921 = vunpack.c.l.b16 %v882
    %v922 = vunpack.c.l.b16 %v883
    %v923 = vunpack.c.l.b16 %v884
    %v924 = vunpack.c.l.b16 %v885
    %v925 = vunpack.c.l.b16 %v886
    %v926 = vunpack.c.l.b16 %v887
    %v927 = vunpack.c.l.b16 %v888
    %v928 = vunpack.c.l.b16 %v889
    %v929 = vunpack.c.l.b16 %v890
    %v930 = vpack.c.b16 %v915, %v914
    %v931 = vpack.c.b16 %v917, %v916
    %v932 = vpack.c.b16 %v919, %v918
    %v933 = vpack.c.b16 %v921, %v920
    %v934 = vpack.c.b16 %v923, %v922
    %v935 = vpack.c.b16 %v925, %v924
    %v936 = vpack.c.b16 %v927, %v926
    %v937 = vpack.c.b16 %v929, %v928
    %946 = vmatprep.subr.bf16.mxu0 0
    %947 = vmatpush1.bf16.msra.mxu0 %v930
    %948 = vmatprep.subr.bf16.mxu0 0
    %949 = vmatpush1.bf16.msra.mxu0 %v931
    %950 = vmatprep.subr.bf16.mxu0 0
    %951 = vmatpush1.bf16.msra.mxu0 %v932
    %952 = vmatprep.subr.bf16.mxu0 0
    %953 = vmatpush1.bf16.msra.mxu0 %v933
    %954 = vmatprep.subr.bf16.mxu0 0
    %955 = vmatpush1.bf16.msra.mxu0 %v934
    %956 = vmatprep.subr.bf16.mxu0 0
    %957 = vmatpush1.bf16.msra.mxu0 %v935
    %958 = vmatprep.subr.bf16.mxu0 0
    %959 = vmatpush1.bf16.msra.mxu0 %v936
    %960 = vmatprep.subr.bf16.mxu0 0
    %961 = vmatpush1.bf16.msra.mxu0 %v937
    %962 = vmatprep.subr.bf16.mxu0 0
    %963 = vmatpush1.bf16.msra.mxu0 0
    %964 = vmatprep.subr.bf16.mxu0 0
    %965 = vmatpush1.bf16.msra.mxu0 0
    %966 = vmatprep.subr.bf16.mxu0 0
    %967 = vmatpush1.bf16.msra.mxu0 0
    %968 = vmatprep.subr.bf16.mxu0 0
    %969 = vmatpush1.bf16.msra.mxu0 0
    %970 = vmatprep.subr.bf16.mxu0 0
    %971 = vmatpush1.bf16.msra.mxu0 0
    %972 = vmatprep.subr.bf16.mxu0 0
    %973 = vmatpush1.bf16.msra.mxu0 0
    %974 = vmatprep.subr.bf16.mxu0 0
    %975 = vmatpush1.bf16.msra.mxu0 0
    %976 = vmatprep.subr.bf16.mxu0 0
    %977 = vmatpush1.bf16.msra.mxu0 0
    %978 = vmatprep.mubr.bf16.mxu0 0
    %979 = vmatmul.mubr.bf16.gmra.mrb[0].mxu0 %v874
    %v980 = vpop.f32.mrb[0].mxu0
    %v981 = vadd.f32 %v896, %v980
    %v982 = vpop.f32.mrb[0].mxu0
    %v983 = vpop.f32.mrb[0].mxu0
    %v984 = vadd.f32 %v896, %v983
    %v985 = vpop.f32.mrb[0].mxu0
    %986 = vdwg.mxu0
    %v987 = vlaneseq
    %v988 = vand.u32 %v987, 127
    %vm989 = vcmp.lt.s32.totalorder %v988, 16
    %v990 = vsel %vm989, %v981, -1e+30
    %v991 = vsel %vm989, %v984, -1e+30
    %992 = vmax.xlane.f32.xlu0 %v990
    %v993 = vpop.xlane.xlu0 %992
    %994 = vmax.xlane.f32.xlu0 %v991
    %v995 = vpop.xlane.xlu0 %994
    %v996 = vsel %vm989, -1e+30, %v981
    %v997 = vsel %vm989, -1e+30, %v984
    %998 = vmax.xlane.f32.xlu0 %v996
    %v999 = vpop.xlane.xlu0 %998
    %1000 = vmax.xlane.f32.xlu0 %v997
    %v1001 = vpop.xlane.xlu0 %1000
    %v1002 = vsel %vm989, %v993, %v999
    %v1003 = vsel %vm989, %v995, %v1001
    %v1004 = vsub.f32 %v981, %v1002
    %v1005 = vsub.f32 %v984, %v1003
    %v1006 = vmul.f32 %v1004, 1.442695
    %v1007 = vpow.pop %v1006
    %v1008 = vmul.f32 %v1005, 1.442695
    %v1009 = vpow.pop %v1008
    %v1010 = vsel %vm989, %v1007, 0.0
    %v1011 = vsel %vm989, %v1009, 0.0
    %1012 = vadd.xlane.f32.xlu0 %v1010
    %v1013 = vpop.xlane.xlu0 %1012
    %1014 = vadd.xlane.f32.xlu0 %v1011
    %v1015 = vpop.xlane.xlu0 %1014
    %1016 = vadd.xlane.f32.xlu0 %v1007
    %v1017 = vpop.xlane.xlu0 %1016
    %1018 = vadd.xlane.f32.xlu0 %v1009
    %v1019 = vpop.xlane.xlu0 %1018
    %v1020 = vsub.f32 %v1017, %v1013
    %v1021 = vsub.f32 %v1019, %v1015
    %v1022 = vsel %vm989, %v1013, %v1020
    %v1023 = vsel %vm989, %v1015, %v1021
    %v1024 = vrcp.pop %v1022
    %v1025 = vmul.f32 %v1007, %v1024
    %v1026 = vrcp.pop %v1023
    %v1027 = vmul.f32 %v1009, %v1026
    %v1028 = vpack.c.bf16 %v1027, %v1025
    %v1030 = vunpack.c.l.b16 %v1028
    %v1031 = vunpack.c.h.b16 %v1028
    %v1032 = vpack.c.b16 %v1030, %v1030
    %v1033 = vpack.c.b16 %v1031, %v1031
    %1036 = vst [vmem:[%s9] sm:$0xf] %v1032
    %1037 = vst [vmem:[%s9 + $0x4] sm:$0xf] %v1033
    // Predicated region
    $region62: #{compress_matrix_network.1} parent=1 // pred_check
      _
    $region63: #{compress_matrix_network.1} parent=1 // pred_check_branch
      %1039 = sbr.rel (0) target = $region65
    $region64: #{compress_matrix_network.1} parent=1 // pred_region
      _
    $region65: #{compress_matrix_network.1} parent=1 // pred_fallthru
      _
    // Predicated region
    $region66: #{compress_matrix_network.1} parent=1 // pred_check
      _
    $region67: #{compress_matrix_network.1} parent=1 // pred_check_branch
      %1041 = sbr.rel (0) target = $region69
    $region68: #{compress_matrix_network.1} parent=1 // pred_region
      _
    $region69: #{compress_matrix_network.1} parent=1 // pred_fallthru
      _
    %1042 = vsyncpa [#allocation3], 1
    %1043 = vsyncpa [#allocation5], 1
    %1044 = vsyncpa [#allocation8], 1
    %1045 = vsyncpa [#allocation11], 1

</llo_original>
